<compile_context>
chip_gen: v7x
topology: tpu7x:2x2x1
jax: 0.10.0
libtpu: 0.0.40
codegen_flags: <defaults>
</compile_context>

<pallas_src>
import functools

import jax
import jax.numpy as jnp
from jax.experimental import pallas as pl
from jax.experimental.pallas import tpu as pltpu


_VMEM_BUDGET = 24 * 1024 * 1024       # per-step working-set target (double-buffered)
_VMEM_LIMIT_CAP = 48 * 1024 * 1024    # stays under v7x's 64 MiB physical VMEM


# ---------------------------------------------------------------------------
# Kernels
# ---------------------------------------------------------------------------
def _patch_merge_fused_kernel(xe_ref, xo_ref, wa_ref, wb_ref, b_ref, out_ref,
                              *, eps, dot_dtype):
    """Fused 2x2 gather + LayerNorm + Linear.

    xe_ref: (th, Wh, 2C)  even-h rows of the 2x2 patches, channels = [x0 | x2]
    xo_ref: (th, Wh, 2C)  odd-h rows,                     channels = [x1 | x3]
    wa_ref: (2C, Dout)    folded weight rows matching [x0 | x2]
    wb_ref: (2C, Dout)    folded weight rows matching [x1 | x3]
    b_ref:  (1, Dout)     beta @ W (f32)
    out_ref:(th*Wh, Dout)
    """
    th, wh, c2 = xe_ref.shape
    rows = th * wh
    din = 2 * c2  # = 4*C

    # LayerNorm statistics in f32 over the full 4C channels of each merged token.
    # (Wh % 8 == 0 is guaranteed by the wrapper, so the flatten is layout-free.)
    e = xe_ref[...].astype(jnp.float32).reshape(rows, c2)
    o = xo_ref[...].astype(jnp.float32).reshape(rows, c2)
    mean = (jnp.sum(e, axis=-1, keepdims=True)
            + jnp.sum(o, axis=-1, keepdims=True)) * (1.0 / din)
    ec = e - mean
    oc = o - mean
    var = (jnp.sum(ec * ec, axis=-1, keepdims=True)
           + jnp.sum(oc * oc, axis=-1, keepdims=True)) * (1.0 / din)
    inv = jax.lax.rsqrt(var + eps)

    # MXU matmuls in the native operand dtype, f32 accumulation.
    en = (ec * inv).astype(dot_dtype)
    on = (oc * inv).astype(dot_dtype)
    y = jnp.dot(en, wa_ref[...], preferred_element_type=jnp.float32)
    y = y + jnp.dot(on, wb_ref[...], preferred_element_type=jnp.float32)
    y = y + b_ref[...]
    out_ref[...] = y.astype(out_ref.dtype)


def _patch_merge_rows_kernel(x_ref, w_ref, b_ref, out_ref, *, eps, dot_dtype):
    """Fallback: LayerNorm + Linear on pre-gathered rows. x_ref: (tm, 4C)."""
    x = x_ref[...].astype(jnp.float32)
    mean = jnp.mean(x, axis=-1, keepdims=True)
    xc = x - mean
    var = jnp.mean(xc * xc, axis=-1, keepdims=True)
    xn = (xc * jax.lax.rsqrt(var + eps)).astype(dot_dtype)
    y = jnp.dot(xn, w_ref[...], preferred_element_type=jnp.float32)
    y = y + b_ref[...]
    out_ref[...] = y.astype(out_ref.dtype)


# ---------------------------------------------------------------------------
# Tile selection helpers
# ---------------------------------------------------------------------------
def _divisors(n):
    return [d for d in range(1, n + 1) if n % d == 0]


def _pick_hh_tile(hh, wh, batch, bytes_per_row, row_target, vmem_budget):
    """Largest divisor of H/2 whose tile fits the VMEM budget / row target,
    preferring >= 2 grid steps (megacore / pipelining)."""
    opts = [d for d in _divisors(hh)
            if d * wh <= max(row_target, wh)
            and d * wh * bytes_per_row <= vmem_budget]
    if not opts:
        opts = [1]
    multi = [d for d in opts if batch * (hh // d) >= 2]
    return max(multi) if multi else max(opts)


def _pick_row_tile(n_rows, bytes_per_row, row_target, vmem_budget):
    """Row tile for the fallback path: divisor of n_rows, sublane-aligned."""
    opts = [d for d in _divisors(n_rows)
            if (d % 8 == 0 or d == n_rows)
            and d <= max(row_target, 8)
            and d * bytes_per_row <= vmem_budget]
    if not opts:
        opts = [n_rows]
    multi = [d for d in opts if n_rows // d >= 2]
    return max(multi) if multi else max(opts)


# ---------------------------------------------------------------------------
# Forward wrappers
# ---------------------------------------------------------------------------
def _forward_fused(x, wa, wb, bias, B, Hh, Wh, C, dout, eps, dot_dtype, row_target):
    din = 4 * C
    # Free view: (B, H*W, C) -> (B, H/2, 2, W/2, 2C); last dims = (W/2, 2C) are
    # full array dims, so the BlockSpec tiling constraint is trivially met.
    x5 = x.reshape(B, Hh, 2, Wh, 2 * C)

    isz = x.dtype.itemsize
    bytes_per_row = 2 * (din * isz + dout * isz)             # double-buffered in+out
    th = _pick_hh_tile(Hh, Wh, B, bytes_per_row, row_target, _VMEM_BUDGET)
    rows = th * Wh
    n_rows = B * Hh * Wh
    n_i = Hh // th

    w_isz = jnp.dtype(dot_dtype).itemsize
    est = rows * bytes_per_row + 2 * (din * dout * w_isz + 4 * dout)
    vmem_limit = int(min(_VMEM_LIMIT_CAP, max(32 * 1024 * 1024, 2 * est)))

    kernel = functools.partial(_patch_merge_fused_kernel, eps=eps, dot_dtype=dot_dtype)
    return pl.pallas_call(
        kernel,
        out_shape=jax.ShapeDtypeStruct((n_rows, dout), x.dtype),
        grid_spec=pltpu.PrefetchScalarGridSpec(
            num_scalar_prefetch=0,
            grid=(B, n_i),
            in_specs=[
                # even-h rows of each 2x2 patch: channels = [x0 | x2]
                pl.BlockSpec((None, th, None, Wh, 2 * C),
                             lambda b, i: (b, i, 0, 0, 0)),
                # odd-h rows: channels = [x1 | x3]
                pl.BlockSpec((None, th, None, Wh, 2 * C),
                             lambda b, i: (b, i, 1, 0, 0)),
                pl.BlockSpec((2 * C, dout), lambda b, i: (0, 0)),
                pl.BlockSpec((2 * C, dout), lambda b, i: (0, 0)),
                pl.BlockSpec((1, dout), lambda b, i: (0, 0)),
            ],
            out_specs=pl.BlockSpec((rows, dout),
                                   lambda b, i, n_i=n_i: (b * n_i + i, 0)),
        ),
        compiler_params=pltpu.CompilerParams(
            dimension_semantics=("parallel", "parallel"),
            vmem_limit_bytes=vmem_limit),
    )(x5, x5, wa, wb, bias)


def _forward_unfused(x, w_folded, bias, B, Hh, Wh, C, dout, eps, dot_dtype, row_target):
    # Fallback when W/2 is not sublane-aligned: gather in plain JAX (one extra
    # HBM round-trip), then run the tiled LayerNorm+matmul kernel.
    H, W = 2 * Hh, 2 * Wh
    din = 4 * C
    xg = x.reshape(B, H, W, C)
    xm = jnp.concatenate([xg[:, 0::2, 0::2, :], xg[:, 1::2, 0::2, :],
                          xg[:, 0::2, 1::2, :], xg[:, 1::2, 1::2, :]], axis=-1)
    n_rows = B * Hh * Wh
    xm = xm.reshape(n_rows, din)

    isz = x.dtype.itemsize
    bytes_per_row = 2 * (din * isz + dout * isz)
    tm = _pick_row_tile(n_rows, bytes_per_row, row_target, _VMEM_BUDGET)
    w_isz = jnp.dtype(dot_dtype).itemsize
    est = tm * bytes_per_row + 2 * (din * dout * w_isz + 4 * dout)
    vmem_limit = int(min(_VMEM_LIMIT_CAP, max(32 * 1024 * 1024, 2 * est)))

    kernel = functools.partial(_patch_merge_rows_kernel, eps=eps, dot_dtype=dot_dtype)
    return pl.pallas_call(
        kernel,
        out_shape=jax.ShapeDtypeStruct((n_rows, dout), x.dtype),
        grid_spec=pltpu.PrefetchScalarGridSpec(
            num_scalar_prefetch=0,
            grid=(n_rows // tm,),
            in_specs=[
                pl.BlockSpec((tm, din), lambda i: (i, 0)),
                pl.BlockSpec((din, dout), lambda i: (0, 0)),
                pl.BlockSpec((1, dout), lambda i: (0, 0)),
            ],
            out_specs=pl.BlockSpec((tm, dout), lambda i: (i, 0)),
        ),
        compiler_params=pltpu.CompilerParams(
            dimension_semantics=("parallel",),
            vmem_limit_bytes=vmem_limit),
    )(xm, w_folded, bias)


def patch_merging_pallas(x, gamma, beta, w_reduction, input_resolution, dim,
                         eps=1e-5, row_target=1024):
    """x: (B, H*W, C) channels-last tokens. Returns (B, H/2*W/2, 2*C)."""
    H, W = input_resolution
    B, L, C = x.shape
    assert L == H * W and C == dim
    assert H % 2 == 0 and W % 2 == 0
    Hh, Wh = H // 2, W // 2
    din = 4 * C
    assert w_reduction.shape[0] == din
    dout = w_reduction.shape[1]

    # Fold the LayerNorm affine into the matmul (done once, in f32):
    #   (LN(x)*gamma + beta) @ W == ((x-mu)*inv_std) @ (gamma[:,None]*W) + beta @ W
    w32 = w_reduction.astype(jnp.float32)
    w_folded32 = gamma.astype(jnp.float32)[:, None] * w32
    bias = beta.astype(jnp.float32)[None, :] @ w32                     # (1, dout), f32
    dot_dtype = jnp.promote_types(x.dtype, w_reduction.dtype)
    w_folded = w_folded32.astype(dot_dtype)

    if Wh % 8 == 0:
        # Split the folded weight to match the fused [x0|x2] / [x1|x3] pairing.
        wa = jnp.concatenate([w_folded[0:C], w_folded[2 * C:3 * C]], axis=0)
        wb = jnp.concatenate([w_folded[C:2 * C], w_folded[3 * C:4 * C]], axis=0)
        out = _forward_fused(x, wa, wb, bias, B, Hh, Wh, C, dout,
                             eps, dot_dtype, row_target)
    else:
        # TODO(synk): W/2 not sublane-aligned -> the in-kernel flatten would need a
        # relayout; use the (slower, un-fused-gather) row-tiled kernel instead.
        out = _forward_unfused(x, w_folded, bias, B, Hh, Wh, C, dout,
                               eps, dot_dtype, row_target)
    return out.reshape(B, Hh * Wh, dout)


# ---------------------------------------------------------------------------
# Pure-JAX reference
# ---------------------------------------------------------------------------
def patch_merging_ref(x, gamma, beta, w_reduction, input_resolution, dim, eps=1e-5):
    H, W = input_resolution
    B, L, C = x.shape
    xg = x.reshape(B, H, W, C)
    x0 = xg[:, 0::2, 0::2, :]
    x1 = xg[:, 1::2, 0::2, :]
    x2 = xg[:, 0::2, 1::2, :]
    x3 = xg[:, 1::2, 1::2, :]
    xm = jnp.concatenate([x0, x1, x2, x3], axis=-1).reshape(B, -1, 4 * C)
    xm = xm.astype(jnp.float32)
    mean = jnp.mean(xm, axis=-1, keepdims=True)
    var = jnp.mean((xm - mean) ** 2, axis=-1, keepdims=True)
    xn = (xm - mean) * jax.lax.rsqrt(var + eps)
    xn = xn * gamma.astype(jnp.float32) + beta.astype(jnp.float32)
    return (xn @ w_reduction.astype(jnp.float32)).astype(x.dtype)


if __name__ == "__main__":
    def make_inputs(key, B, H, W, dim, dtype):
        kx, kg, kb, kw = jax.random.split(key, 4)
        x = jax.random.normal(kx, (B, H * W, dim), dtype=jnp.float32).astype(dtype)
        gamma = (1.0 + 0.1 * jax.random.normal(kg, (4 * dim,), jnp.float32)).astype(dtype)
        beta = (0.1 * jax.random.normal(kb, (4 * dim,), jnp.float32)).astype(dtype)
        # stored as (Din, Dout) = PyTorch weight.T, so y = x @ w
        w = (jax.random.normal(kw, (4 * dim, 2 * dim), jnp.float32)
             / jnp.sqrt(4.0 * dim)).astype(dtype)
        return x, gamma, beta, w

    # Case 1: fused-gather path (W/2 % 8 == 0), f32.
    B, dim, H, W = 2, 32, 16, 16
    x, gamma, beta, w = make_inputs(jax.random.PRNGKey(0), B, H, W, dim, jnp.float32)
    out = jax.block_until_ready(patch_merging_pallas(x, gamma, beta, w, (H, W), dim))
    ref = patch_merging_ref(x, gamma, beta, w, (H, W), dim)
    assert out.shape == (B, (H // 2) * (W // 2), 2 * dim)
    assert jnp.allclose(out, ref, atol=2e-4, rtol=2e-4), "fused f32 mismatch"

    # Case 2: bf16 I/O (MXU-native operands; LayerNorm math stays f32).
    xb, gb, bb, wb = make_inputs(jax.random.PRNGKey(1), B, H, W, dim, jnp.bfloat16)
    outb = jax.block_until_ready(patch_merging_pallas(xb, gb, bb, wb, (H, W), dim))
    refb = patch_merging_ref(xb, gb, bb, wb, (H, W), dim)
    assert jnp.allclose(outb.astype(jnp.float32), refb.astype(jnp.float32),
                        atol=5e-2, rtol=5e-2), "fused bf16 mismatch"

    # Case 3: fallback path (W/2 not a multiple of 8), f32.
    x3, g3, b3, w3 = make_inputs(jax.random.PRNGKey(2), 2, 12, 12, 32, jnp.float32)
    out3 = jax.block_until_ready(patch_merging_pallas(x3, g3, b3, w3, (12, 12), 32))
    ref3 = patch_merging_ref(x3, g3, b3, w3, (12, 12), 32)
    assert jnp.allclose(out3, ref3, atol=2e-4, rtol=2e-4), "fallback mismatch"

    # TODO(synk): source forward() is `pass`; canonical Swin PatchMerging
    # semantics (2x2 merge -> LayerNorm -> Linear 4C->2C) were implemented.
    print("KERNEL_OK")
</pallas_src>

<mosaic_0001>
module attributes {stable_mosaic.version = 11 : i64} {
  func.func @_patch_merge_fused_kernel(%arg0: i32, %arg1: i32, %arg2: memref<1x8x1x8x64xf32, #tpu.memory_space<vmem>>, %arg3: memref<1x8x1x8x64xf32, #tpu.memory_space<vmem>>, %arg4: memref<64x64xf32, #tpu.memory_space<vmem>>, %arg5: memref<64x64xf32, #tpu.memory_space<vmem>>, %arg6: memref<1x64xf32, #tpu.memory_space<vmem>>, %arg7: memref<64x64xf32, #tpu.memory_space<vmem>>) attributes {dimension_semantics = [#tpu.dimension_semantics<parallel>, #tpu.dimension_semantics<parallel>], iteration_bounds = array<i64: 2, 1>, scalar_prefetch = 0 : i64, scratch_operands = 0 : i64, tpu.core_type = #tpu.core_type<tc>, window_params = [{transform_indices = @transform_0, window_bounds = array<i64: 1, 8, 1, 8, 64>}, {transform_indices = @transform_1, window_bounds = array<i64: 1, 8, 1, 8, 64>}, {pipeline_mode = #tpu.pipeline_mode<synchronous>, transform_indices = @transform_2, window_bounds = array<i64: 64, 64>}, {pipeline_mode = #tpu.pipeline_mode<synchronous>, transform_indices = @transform_3, window_bounds = array<i64: 64, 64>}, {pipeline_mode = #tpu.pipeline_mode<synchronous>, transform_indices = @transform_4, window_bounds = array<i64: 1, 64>}, {transform_indices = @transform_5, window_bounds = array<i64: 64, 64>}]} {
    %c0 = arith.constant 0 : index
    %c0_0 = arith.constant 0 : index
    %c0_1 = arith.constant 0 : index
    %c0_2 = arith.constant 0 : index
    %c0_3 = arith.constant 0 : index
    %0 = vector.load %arg2[%c0, %c0_0, %c0_1, %c0_2, %c0_3] : memref<1x8x1x8x64xf32, #tpu.memory_space<vmem>>, vector<1x8x1x8x64xf32>
    %1 = vector.shape_cast %0 : vector<1x8x1x8x64xf32> to vector<8x8x64xf32>
    %2 = vector.shape_cast %1 : vector<8x8x64xf32> to vector<64x64xf32>
    %c0_4 = arith.constant 0 : index
    %c0_5 = arith.constant 0 : index
    %c0_6 = arith.constant 0 : index
    %c0_7 = arith.constant 0 : index
    %c0_8 = arith.constant 0 : index
    %3 = vector.load %arg3[%c0_4, %c0_5, %c0_6, %c0_7, %c0_8] : memref<1x8x1x8x64xf32, #tpu.memory_space<vmem>>, vector<1x8x1x8x64xf32>
    %4 = vector.shape_cast %3 : vector<1x8x1x8x64xf32> to vector<8x8x64xf32>
    %5 = vector.shape_cast %4 : vector<8x8x64xf32> to vector<64x64xf32>
    %cst = arith.constant dense<0.000000e+00> : vector<64xf32>
    %6 = vector.multi_reduction <add>, %2, %cst [1] : vector<64x64xf32> to vector<64xf32>
    %7 = vector.shape_cast %6 : vector<64xf32> to vector<64x1xf32>
    %cst_9 = arith.constant dense<0.000000e+00> : vector<64xf32>
    %8 = vector.multi_reduction <add>, %5, %cst_9 [1] : vector<64x64xf32> to vector<64xf32>
    %9 = vector.shape_cast %8 : vector<64xf32> to vector<64x1xf32>
    %10 = arith.addf %7, %9 : vector<64x1xf32>
    %cst_10 = arith.constant 7.812500e-03 : f32
    %11 = vector.broadcast %cst_10 : f32 to vector<64x1xf32>
    %12 = arith.mulf %10, %11 : vector<64x1xf32>
    %13 = vector.broadcast %12 : vector<64x1xf32> to vector<64x64xf32>
    %14 = arith.subf %2, %13 : vector<64x64xf32>
    %15 = vector.broadcast %12 : vector<64x1xf32> to vector<64x64xf32>
    %16 = arith.subf %5, %15 : vector<64x64xf32>
    %17 = arith.mulf %14, %14 : vector<64x64xf32>
    %cst_11 = arith.constant dense<0.000000e+00> : vector<64xf32>
    %18 = vector.multi_reduction <add>, %17, %cst_11 [1] : vector<64x64xf32> to vector<64xf32>
    %19 = vector.shape_cast %18 : vector<64xf32> to vector<64x1xf32>
    %20 = arith.mulf %16, %16 : vector<64x64xf32>
    %cst_12 = arith.constant dense<0.000000e+00> : vector<64xf32>
    %21 = vector.multi_reduction <add>, %20, %cst_12 [1] : vector<64x64xf32> to vector<64xf32>
    %22 = vector.shape_cast %21 : vector<64xf32> to vector<64x1xf32>
    %23 = arith.addf %19, %22 : vector<64x1xf32>
    %cst_13 = arith.constant 7.812500e-03 : f32
    %24 = vector.broadcast %cst_13 : f32 to vector<64x1xf32>
    %25 = arith.mulf %23, %24 : vector<64x1xf32>
    %cst_14 = arith.constant 9.99999974E-6 : f32
    %26 = vector.broadcast %cst_14 : f32 to vector<64x1xf32>
    %27 = arith.addf %25, %26 : vector<64x1xf32>
    %28 = math.rsqrt %27 : vector<64x1xf32>
    %29 = vector.broadcast %28 : vector<64x1xf32> to vector<64x64xf32>
    %30 = arith.mulf %14, %29 : vector<64x64xf32>
    %31 = vector.broadcast %28 : vector<64x1xf32> to vector<64x64xf32>
    %32 = arith.mulf %16, %31 : vector<64x64xf32>
    %c0_15 = arith.constant 0 : index
    %c0_16 = arith.constant 0 : index
    %33 = vector.load %arg4[%c0_15, %c0_16] : memref<64x64xf32, #tpu.memory_space<vmem>>, vector<64x64xf32>
    %cst_17 = arith.constant dense<0.000000e+00> : vector<64x64xf32>
    %34 = tpu.matmul %30, %33, %cst_17 {dimension_numbers = #tpu.dot_dimension_numbers<[1], [0], [0], [1], [0, 0, 1, 1], [], []>} : vector<64x64xf32>, vector<64x64xf32>, vector<64x64xf32> -> vector<64x64xf32>
    %c0_18 = arith.constant 0 : index
    %c0_19 = arith.constant 0 : index
    %35 = vector.load %arg5[%c0_18, %c0_19] : memref<64x64xf32, #tpu.memory_space<vmem>>, vector<64x64xf32>
    %cst_20 = arith.constant dense<0.000000e+00> : vector<64x64xf32>
    %36 = tpu.matmul %32, %35, %cst_20 {dimension_numbers = #tpu.dot_dimension_numbers<[1], [0], [0], [1], [0, 0, 1, 1], [], []>} : vector<64x64xf32>, vector<64x64xf32>, vector<64x64xf32> -> vector<64x64xf32>
    %37 = arith.addf %34, %36 : vector<64x64xf32>
    %c0_21 = arith.constant 0 : index
    %c0_22 = arith.constant 0 : index
    %38 = vector.load %arg6[%c0_21, %c0_22] : memref<1x64xf32, #tpu.memory_space<vmem>>, vector<1x64xf32>
    %39 = vector.broadcast %38 : vector<1x64xf32> to vector<64x64xf32>
    %40 = arith.addf %37, %39 : vector<64x64xf32>
    %c0_23 = arith.constant 0 : index
    %c0_24 = arith.constant 0 : index
    %41 = vector.load %arg7[%c0_23, %c0_24] : memref<64x64xf32, #tpu.memory_space<vmem>>, vector<64x64xf32>
    tpu.vector_store %arg7[%c0_23, %c0_24], %40 {strides = array<i32>} : memref<64x64xf32, #tpu.memory_space<vmem>>, vector<64x64xf32>,
    return
  }
  func.func @transform_0(%arg0: i32, %arg1: i32) -> (i32, i32, i32, i32, i32) {
    %c0_i32 = arith.constant 0 : i32
    %c0_i32_0 = arith.constant 0 : i32
    %c0_i32_1 = arith.constant 0 : i32
    %c0_i32_2 = arith.constant 0 : i32
    return %arg0, %arg1, %c0_i32, %c0_i32_0, %c0_i32_1 : i32, i32, i32, i32, i32
  }
  func.func @transform_1(%arg0: i32, %arg1: i32) -> (i32, i32, i32, i32, i32) {
    %c1_i32 = arith.constant 1 : i32
    %c0_i32 = arith.constant 0 : i32
    %c0_i32_0 = arith.constant 0 : i32
    %c0_i32_1 = arith.constant 0 : i32
    return %arg0, %arg1, %c1_i32, %c0_i32, %c0_i32_0 : i32, i32, i32, i32, i32
  }
  func.func @transform_2(%arg0: i32, %arg1: i32) -> (i32, i32) {
    %c0_i32 = arith.constant 0 : i32
    %c0_i32_0 = arith.constant 0 : i32
    %c0_i32_1 = arith.constant 0 : i32
    return %c0_i32, %c0_i32_0 : i32, i32
  }
  func.func @transform_3(%arg0: i32, %arg1: i32) -> (i32, i32) {
    %c0_i32 = arith.constant 0 : i32
    %c0_i32_0 = arith.constant 0 : i32
    %c0_i32_1 = arith.constant 0 : i32
    return %c0_i32, %c0_i32_0 : i32, i32
  }
  func.func @transform_4(%arg0: i32, %arg1: i32) -> (i32, i32) {
    %c0_i32 = arith.constant 0 : i32
    %c0_i32_0 = arith.constant 0 : i32
    %c0_i32_1 = arith.constant 0 : i32
    return %c0_i32, %c0_i32_0 : i32, i32
  }
  func.func @transform_5(%arg0: i32, %arg1: i32) -> (i32, i32) {
    %c1_i32 = arith.constant 1 : i32
    %0 = arith.muli %arg0, %c1_i32 : i32
    %1 = arith.addi %0, %arg1 : i32
    %c0_i32 = arith.constant 0 : i32
    %c0_i32_0 = arith.constant 0 : i32
    return %1, %c0_i32 : i32, i32
  }
}

</mosaic_0001>

<llo_original>
// kernel: tpu_custom_call.1
$region0: #{tpu_custom_call.1}
  #allocation0 [shape = 'u32[]', space=smem, size = 0x4, offset = 0x4, fixed_abs, tag = 'smem constant byte address 0x4 - core index']
  #allocation1 [shape = 'u32[144,128]{1,0:T(1,128)}', space=vmem, size = 0x12000, scoped, tag = 'internal scratch']
  %s0 = inlined_call_operand.hbm [shape: f32[2,8,2,8,64], index: 0, kind: input, shape index: {}]
  %s1 = inlined_call_operand.hbm [shape: f32[2,8,2,8,64], index: 1, kind: input, shape index: {}]
  %s2 = inlined_call_operand.hbm [shape: f32[64,64], index: 2, kind: input, shape index: {}]
  %s3 = inlined_call_operand.hbm [shape: f32[64,64], index: 3, kind: input, shape index: {}]
  %s4 = inlined_call_operand.vmem [shape: f32[1,64], index: 4, kind: input, shape index: {}]
  %s5 = inlined_call_operand.vmem [shape: f32[128,64], index: 5, kind: output, shape index: {}]
  %s6 = sld [smem:[#allocation0]]
  $region69: #{tpu_custom_call.1} parent=0
    _
  %s8 = ssub.s32 1, %s6
  %s9 = scalar_select 0, %s8, %s6
  $region1: #{tpu_custom_call.1} parent=0
    #allocation2 [shape = 'u8[65536]{0}', space=vmem, size = 0x10000, scoped, tag = 'input window, operand 0']
    #allocation3 [shape = 's32[2]{0}', space=sflag, size = 0x8, scoped, tag = 'scoped memory for tpu_custom_call.1']
    #allocation4 [shape = 'u8[65536]{0}', space=vmem, size = 0x10000, scoped, tag = 'input window, operand 1']
    #allocation5 [shape = 's32[2]{0}', space=sflag, size = 0x8, scoped, tag = 'scoped memory for tpu_custom_call.1']
    #allocation6 [shape = 'u8[32768]{0}', space=vmem, size = 0x8000, scoped, tag = 'input window, operand 2, single buffered']
    #allocation7 [shape = 'u8[32768]{0}', space=vmem, size = 0x8000, scoped, tag = 'input window, operand 3, single buffered']
    #allocation8 [shape = 's32[1]{0}', space=sflag, size = 0x4, scoped, tag = 'scoped memory for tpu_custom_call.1']
    %10 = vsyncpa [#allocation3], 0
    %s11 = scalar_lea.sflag [#allocation3], 1
    %12 = vsyncpa %s11, 0
    %13 = vsyncpa [#allocation5], 0
    %s14 = scalar_lea.sflag [#allocation5], 1
    %15 = vsyncpa %s14, 0
    %16 = vsyncpa [#allocation8], 0
    loop: start=0, step=1, limit=4
    $region2: #{tpu_custom_call.1} parent=1 // loop_pre_header
      _
    $region3: #{tpu_custom_call.1} parent=1 // loop_header
      %s18 = sphi 0, %s22
      %p19 = scmp.ge.s32.totalorder %s18, 4
      %s25 = sphi 0, %s37
      %s26 = sphi 0, %s33
      %s27 = sphi 0, %s25
      %s28 = sphi 0, %s26
      %s29 = sphi 0, %s27
      %s30 = sphi 0, %s28
      %s42 = sphi 0, %s44
      %s45 = sphi 0, %s42
      %s46 = sphi 0, %s45
      %s62 = sphi 0, %s46
      %s70 = sphi 0, %s72
      %s73 = sphi 0, %s70
      %s74 = sphi 0, %s73
      %s90 = sphi 0, %s74
      %s94 = sphi 0, %s94
      %s96 = sphi 0, %s94
      %s97 = sphi 0, %s96
      %s111 = sphi 0, %s97
      %s115 = sphi 0, %s115
      %s117 = sphi 0, %s115
      %s118 = sphi 0, %s117
      %s132 = sphi 0, %s118
      %s136 = sphi 0, %s136
      %s138 = sphi 0, %s136
      %s139 = sphi 0, %s138
      %s153 = sphi 0, %s139
      %s161 = sphi 0, %s163
      %s164 = sphi 0, %s161
      %s165 = sphi 0, %s164
      %s181 = sphi 0, %s165
    $region4: #{tpu_custom_call.1} parent=1 // loop_header_branch
      %21 = sbr.rel (%p19) target = $region8
    $region5: #{tpu_custom_call.1} parent=1 // loop_body
      %s23 = ssub.s32 %s18, 1
      %s24 = ssub.s32 %s18, 2
      %s31 = sadd.s32 1, %s26
      %p32 = scmp.ge.s32.totalorder %s31, 1
      %s33 = scalar_select %p32, 0, %s31
      %s34 = sadd.s32 1, %s25
      %s35 = scalar_select %p32, %s34, %s25
      %p36 = scmp.ge.s32.totalorder %s35, 2
      %s37 = scalar_select %p36, 0, %s35
      %s38 = ssub.s32 %s25, %s37
      %s39 = ssub.s32 %s26, %s33
      %s40 = sor.u32 %s38, %s39
      %p41 = scmp.eq.s32.totalorder %s40, 0
      %s43 = sadd.s32 %s42, 1
      %s44 = scalar_select %p41, %s42, %s43
      %p47 = pneg %p41
      %p48 = scmp.eq.s32.totalorder %s18, 1
      %p49 = por %p47, %p48
      %p50 = scmp.ne.s32.totalorder %s42, %s45
      %p51 = scmp.eq.s32.totalorder %s18, 0
      %p52 = por %p50, %p51
      %p53 = scmp.ne.s32.totalorder %s42, %s45
      %p54 = scmp.eq.s32.totalorder %s23, 1
      %p55 = por %p53, %p54
      %p56 = scmp.ne.s32.totalorder %s45, %s46
      %p57 = scmp.eq.s32.totalorder %s23, 0
      %p58 = por %p56, %p57
      %p59 = scmp.ne.s32.totalorder %s45, %s46
      %p60 = scmp.eq.s32.totalorder %s24, 1
      %p61 = por %p59, %p60
      %p63 = scmp.ne.s32.totalorder %s46, %s62
      %p64 = scmp.eq.s32.totalorder %s24, 0
      %p65 = por %p63, %p64
      %s66 = ssub.s32 %s25, %s37
      %s67 = ssub.s32 %s26, %s33
      %s68 = sor.u32 %s66, %s67
      %p69 = scmp.eq.s32.totalorder %s68, 0
      %s71 = sadd.s32 %s70, 1
      %s72 = scalar_select %p69, %s70, %s71
      %p75 = pneg %p69
      %p76 = scmp.eq.s32.totalorder %s18, 1
      %p77 = por %p75, %p76
      %p78 = scmp.ne.s32.totalorder %s70, %s73
      %p79 = scmp.eq.s32.totalorder %s18, 0
      %p80 = por %p78, %p79
      %p81 = scmp.ne.s32.totalorder %s70, %s73
      %p82 = scmp.eq.s32.totalorder %s23, 1
      %p83 = por %p81, %p82
      %p84 = scmp.ne.s32.totalorder %s73, %s74
      %p85 = scmp.eq.s32.totalorder %s23, 0
      %p86 = por %p84, %p85
      %p87 = scmp.ne.s32.totalorder %s73, %s74
      %p88 = scmp.eq.s32.totalorder %s24, 1
      %p89 = por %p87, %p88
      %p91 = scmp.ne.s32.totalorder %s74, %s90
      %p92 = scmp.eq.s32.totalorder %s24, 0
      %p93 = por %p91, %p92
      %s95 = sadd.s32 %s94, 1
      %p98 = scmp.eq.s32.totalorder %s18, 1
      %p99 = scmp.ne.s32.totalorder %s94, %s96
      %p100 = scmp.eq.s32.totalorder %s18, 0
      %p101 = por %p99, %p100
      %p102 = scmp.ne.s32.totalorder %s94, %s96
      %p103 = scmp.eq.s32.totalorder %s23, 1
      %p104 = por %p102, %p103
      %p105 = scmp.ne.s32.totalorder %s96, %s97
      %p106 = scmp.eq.s32.totalorder %s23, 0
      %p107 = por %p105, %p106
      %p108 = scmp.ne.s32.totalorder %s96, %s97
      %p109 = scmp.eq.s32.totalorder %s24, 1
      %p110 = por %p108, %p109
      %p112 = scmp.ne.s32.totalorder %s97, %s111
      %p113 = scmp.eq.s32.totalorder %s24, 0
      %p114 = por %p112, %p113
      %s116 = sadd.s32 %s115, 1
      %p119 = scmp.eq.s32.totalorder %s18, 1
      %p120 = scmp.ne.s32.totalorder %s115, %s117
      %p121 = scmp.eq.s32.totalorder %s18, 0
      %p122 = por %p120, %p121
      %p123 = scmp.ne.s32.totalorder %s115, %s117
      %p124 = scmp.eq.s32.totalorder %s23, 1
      %p125 = por %p123, %p124
      %p126 = scmp.ne.s32.totalorder %s117, %s118
      %p127 = scmp.eq.s32.totalorder %s23, 0
      %p128 = por %p126, %p127
      %p129 = scmp.ne.s32.totalorder %s117, %s118
      %p130 = scmp.eq.s32.totalorder %s24, 1
      %p131 = por %p129, %p130
      %p133 = scmp.ne.s32.totalorder %s118, %s132
      %p134 = scmp.eq.s32.totalorder %s24, 0
      %p135 = por %p133, %p134
      %s137 = sadd.s32 %s136, 1
      %p140 = scmp.eq.s32.totalorder %s18, 1
      %p141 = scmp.ne.s32.totalorder %s136, %s138
      %p142 = scmp.eq.s32.totalorder %s18, 0
      %p143 = por %p141, %p142
      %p144 = scmp.ne.s32.totalorder %s136, %s138
      %p145 = scmp.eq.s32.totalorder %s23, 1
      %p146 = por %p144, %p145
      %p147 = scmp.ne.s32.totalorder %s138, %s139
      %p148 = scmp.eq.s32.totalorder %s23, 0
      %p149 = por %p147, %p148
      %p150 = scmp.ne.s32.totalorder %s138, %s139
      %p151 = scmp.eq.s32.totalorder %s24, 1
      %p152 = por %p150, %p151
      %p154 = scmp.ne.s32.totalorder %s139, %s153
      %p155 = scmp.eq.s32.totalorder %s24, 0
      %p156 = por %p154, %p155
      %s157 = sadd.s32 %s25, %s26
      %s158 = sadd.s32 %s37, %s33
      %s159 = ssub.s32 %s157, %s158
      %p160 = scmp.eq.s32.totalorder %s159, 0
      %s162 = sadd.s32 %s161, 1
      %s163 = scalar_select %p160, %s161, %s162
      %p166 = pneg %p160
      %p167 = scmp.eq.s32.totalorder %s18, 1
      %p168 = por %p166, %p167
      %p169 = scmp.ne.s32.totalorder %s161, %s164
      %p170 = scmp.eq.s32.totalorder %s18, 0
      %p171 = por %p169, %p170
      %p172 = scmp.ne.s32.totalorder %s161, %s164
      %p173 = scmp.eq.s32.totalorder %s23, 1
      %p174 = por %p172, %p173
      %p175 = scmp.ne.s32.totalorder %s164, %s165
      %p176 = scmp.eq.s32.totalorder %s23, 0
      %p177 = por %p175, %p176
      %p178 = scmp.ne.s32.totalorder %s164, %s165
      %p179 = scmp.eq.s32.totalorder %s24, 1
      %p180 = por %p178, %p179
      %p182 = scmp.ne.s32.totalorder %s165, %s181
      %p183 = scmp.eq.s32.totalorder %s24, 0
      %p184 = por %p182, %p183
      %p185 = scmp.le.s32.totalorder 1, %s18
      %p186 = scmp.lt.s32.totalorder %s18, 3
      %p187 = pnand %p185, %p186
      %p188 = pneg %p187
      // Predicated region
      $region9: #{tpu_custom_call.1} parent=5 // pred_check
        _
      $region10: #{tpu_custom_call.1} parent=5 // pred_check_branch
        %190 = sbr.rel (%p187) target = $region12
      $region11: #{tpu_custom_call.1} parent=5 // pred_region
        %s191 = ssub.s32 %s18, 1
        // Predicated region
        $region13: #{tpu_custom_call.1} parent=11 // pred_check
          %p192 = pneg %p107
        $region14: #{tpu_custom_call.1} parent=11 // pred_check_branch
          %194 = sbr.rel (%p192) target = $region16
        $region15: #{tpu_custom_call.1} parent=11 // pred_region
          %s196 = ssub.s32 1024, 1024
          %197 = vsyncadd [#allocation5], %s196
          %s198 = sshll.u32 [#allocation6], 4
          %s199 = int_to_ptr.vmem [resolvable:$true] %s198
          %204 = dma.hbm_to_vmem [thread:$0]  %s2, 1024, %s199, [#allocation5], 128, 128, 8
        $region16: #{tpu_custom_call.1} parent=11 // pred_fallthru
          _
        // Predicated region
        $region17: #{tpu_custom_call.1} parent=11 // pred_check
          %p205 = pneg %p128
        $region18: #{tpu_custom_call.1} parent=11 // pred_check_branch
          %207 = sbr.rel (%p205) target = $region20
        $region19: #{tpu_custom_call.1} parent=11 // pred_region
          %s209 = ssub.s32 1024, 1024
          %210 = vsyncadd [#allocation8], %s209
          %s211 = sshll.u32 [#allocation7], 4
          %s212 = int_to_ptr.vmem [resolvable:$true] %s211
          %217 = dma.hbm_to_vmem [thread:$0]  %s3, 1024, %s212, [#allocation8], 128, 128, 8
        $region20: #{tpu_custom_call.1} parent=11 // pred_fallthru
          _
        // Predicated region
        $region21: #{tpu_custom_call.1} parent=11 // pred_check
          %p218 = pneg %p149
        $region22: #{tpu_custom_call.1} parent=11 // pred_check_branch
          %220 = sbr.rel (%p218) target = $region24
        $region23: #{tpu_custom_call.1} parent=11 // pred_region
          _
        $region24: #{tpu_custom_call.1} parent=11 // pred_fallthru
          _
      $region12: #{tpu_custom_call.1} parent=5 // pred_fallthru
        _
      %p221 = scmp.lt.s32.totalorder %s18, 2
      // Predicated region
      $region25: #{tpu_custom_call.1} parent=5 // pred_check
        %p222 = pneg %p221
      $region26: #{tpu_custom_call.1} parent=5 // pred_check_branch
        %224 = sbr.rel (%p222) target = $region28
      $region27: #{tpu_custom_call.1} parent=5 // pred_region
        // Predicated region
        $region29: #{tpu_custom_call.1} parent=27 // pred_check
          %p225 = pneg %p52
        $region30: #{tpu_custom_call.1} parent=27 // pred_check_branch
          %227 = sbr.rel (%p225) target = $region32
        $region31: #{tpu_custom_call.1} parent=27 // pred_region
          %s228 = sand.u32 %s42, 1
          %s229 = scalar_lea.sflag [#allocation3], %s228
          %s230 = sand.u32 %s42, 1
          %s231 = smul.addr %s230, 64
          %s232 = scalar_lea.vmem [#allocation2], %s231
          %s233 = smul.u32 8, %s26
          %s235 = ssub.s32 1024, 1024
          %236 = vsyncadd %s229, %s235
          %s237 = smul.addr %s233, 2
          %s238 = smul.addr %s25, 16
          %s239 = sadd.s32 %s237, %s238
          %s240 = smul.addr %s239, 128
          %s241 = scalar_lea.hbm %s0, %s240
          %s242 = sshll.u32 %s232, 4
          %s243 = int_to_ptr.vmem [resolvable:$true] %s242
          %248 = dma.hbm_to_vmem [thread:$0]  %s241, 1024, %s243, %s229, 256, 128, 8
        $region32: #{tpu_custom_call.1} parent=27 // pred_fallthru
          _
        // Predicated region
        $region33: #{tpu_custom_call.1} parent=27 // pred_check
          %p249 = pneg %p80
        $region34: #{tpu_custom_call.1} parent=27 // pred_check_branch
          %251 = sbr.rel (%p249) target = $region36
        $region35: #{tpu_custom_call.1} parent=27 // pred_region
          %s252 = sand.u32 %s18, 1
          %s253 = scalar_lea.sflag [#allocation5], %s252
          %s254 = sand.u32 %s70, 1
          %s255 = smul.addr %s254, 64
          %s256 = scalar_lea.vmem [#allocation4], %s255
          %s257 = smul.u32 8, %s26
          %s259 = ssub.s32 1024, 1024
          %260 = vsyncadd %s253, %s259
          %s261 = smul.addr %s257, 2
          %s262 = sadd.s32 1, %s261
          %s263 = smul.addr %s25, 16
          %s264 = sadd.s32 %s262, %s263
          %s265 = smul.addr %s264, 128
          %s266 = scalar_lea.hbm %s1, %s265
          %s267 = sshll.u32 %s256, 4
          %s268 = int_to_ptr.vmem [resolvable:$true] %s267
          %273 = dma.hbm_to_vmem [thread:$0]  %s266, 1024, %s268, %s253, 256, 128, 8
        $region36: #{tpu_custom_call.1} parent=27 // pred_fallthru
          _
      $region28: #{tpu_custom_call.1} parent=5 // pred_fallthru
        _
      %p274 = scmp.le.s32.totalorder 1, %s18
      %p275 = scmp.lt.s32.totalorder %s18, 3
      %p276 = pnand %p274, %p275
      %p277 = pneg %p276
      // Predicated region
      $region37: #{tpu_custom_call.1} parent=5 // pred_check
        _
      $region38: #{tpu_custom_call.1} parent=5 // pred_check_branch
        %279 = sbr.rel (%p276) target = $region40
      $region39: #{tpu_custom_call.1} parent=5 // pred_region
        %s280 = ssub.s32 %s18, 1
        %s281 = sand.u32 %s45, 1
        %s282 = scalar_lea.sflag [#allocation3], %s281
        %s283 = sand.u32 %s45, 1
        %s284 = smul.addr %s283, 64
        %s285 = scalar_lea.vmem [#allocation2], %s284
        // Predicated region
        $region41: #{tpu_custom_call.1} parent=39 // pred_check
          %p286 = pneg %p58
        $region42: #{tpu_custom_call.1} parent=39 // pred_check_branch
          %288 = sbr.rel (%p286) target = $region44
        $region43: #{tpu_custom_call.1} parent=39 // pred_region
          %289 = dma.done %s282, 1024
        $region44: #{tpu_custom_call.1} parent=39 // pred_fallthru
          _
        %s290 = sand.u32 %s23, 1
        %s291 = scalar_lea.sflag [#allocation5], %s290
        %s292 = sand.u32 %s73, 1
        %s293 = smul.addr %s292, 64
        %s294 = scalar_lea.vmem [#allocation4], %s293
        // Predicated region
        $region45: #{tpu_custom_call.1} parent=39 // pred_check
          %p295 = pneg %p86
        $region46: #{tpu_custom_call.1} parent=39 // pred_check_branch
          %297 = sbr.rel (%p295) target = $region48
        $region47: #{tpu_custom_call.1} parent=39 // pred_region
          %298 = dma.done %s291, 1024
        $region48: #{tpu_custom_call.1} parent=39 // pred_fallthru
          _
        // Predicated region
        $region49: #{tpu_custom_call.1} parent=39 // pred_check
          %p299 = pneg %p107
        $region50: #{tpu_custom_call.1} parent=39 // pred_check_branch
          %301 = sbr.rel (%p299) target = $region52
        $region51: #{tpu_custom_call.1} parent=39 // pred_region
          %302 = dma.done [#allocation5], 1024
        $region52: #{tpu_custom_call.1} parent=39 // pred_fallthru
          _
        // Predicated region
        $region53: #{tpu_custom_call.1} parent=39 // pred_check
          %p303 = pneg %p128
        $region54: #{tpu_custom_call.1} parent=39 // pred_check_branch
          %305 = sbr.rel (%p303) target = $region56
        $region55: #{tpu_custom_call.1} parent=39 // pred_region
          %306 = dma.done [#allocation8], 1024
        $region56: #{tpu_custom_call.1} parent=39 // pred_fallthru
          _
        %s307 = sand.u32 %s45, 1
        %s308 = scalar_lea.sflag [#allocation3], %s307
        %s309 = sand.u32 %s45, 1
        %s310 = smul.addr %s309, 64
        %s311 = scalar_lea.vmem [#allocation2], %s310
        %p312 = pneg %p58
        %p313 = pneg %p55
        %s314 = sand.u32 %s23, 1
        %s315 = scalar_lea.sflag [#allocation5], %s314
        %s316 = sand.u32 %s73, 1
        %s317 = smul.addr %s316, 64
        %s318 = scalar_lea.vmem [#allocation4], %s317
        %p319 = pneg %p86
        %p320 = pneg %p83
        %p321 = pneg %p107
        %p322 = pneg %p104
        %p323 = pneg %p128
        %p324 = pneg %p125
        %p325 = pneg %p149
        %p326 = pneg %p146
        %p327 = pneg %p177
        %p328 = pneg %p174
        %s329 = sadd.s32 %s27, %s28
        %s330 = smul.u32 8, %s329
        %p331 = scmp.lt.s32.totalorder %s330, 15
        %s332 = scalar_select %p331, %s330, 15
        %s333 = smul.addr %s332, 8
        %s334 = scalar_lea.vmem %s5, %s333
        %s335 = smul.u32 8, %s28
        %s336 = smul.u32 8, %s28
        %s337 = sadd.s32 %s27, %s28
        %s338 = smul.u32 8, %s337
        %p339 = scmp.lt.s32.totalorder %s338, 15
        %s340 = scalar_select %p339, %s338, 15
        %s341 = smul.addr %s340, 8
        %s342 = scalar_lea.vmem %s5, %s341
        %s343 = sadd.s32 %s27, %s28
        %s344 = smul.u32 8, %s343
        %v345 = vld [vmem:[%s285] sm:$0xff]
        %v346 = vld [vmem:[%s285 + $0x8] sm:$0xff]
        %v347 = vld [vmem:[%s285 + $0x10] sm:$0xff]
        %v348 = vld [vmem:[%s285 + $0x18] sm:$0xff]
        %v349 = vld [vmem:[%s285 + $0x20] sm:$0xff]
        %v350 = vld [vmem:[%s285 + $0x28] sm:$0xff]
        %v351 = vld [vmem:[%s285 + $0x30] sm:$0xff]
        %v352 = vld [vmem:[%s285 + $0x38] sm:$0xff]
        %v353 = vld [vmem:[%s294] sm:$0xff]
        %v354 = vld [vmem:[%s294 + $0x8] sm:$0xff]
        %v355 = vld [vmem:[%s294 + $0x10] sm:$0xff]
        %v356 = vld [vmem:[%s294 + $0x18] sm:$0xff]
        %v357 = vld [vmem:[%s294 + $0x20] sm:$0xff]
        %v358 = vld [vmem:[%s294 + $0x28] sm:$0xff]
        %v359 = vld [vmem:[%s294 + $0x30] sm:$0xff]
        %v360 = vld [vmem:[%s294 + $0x38] sm:$0xff]
        %vm361 = vcmask 523264
        %v362 = vsel %vm361, %v345, 0.0
        %363 = vadd.xlane.f32.xlu0 %v362
        %v364 = vpop.xlane.xlu0 %363
        %v365 = vsel %vm361, %v346, 0.0
        %366 = vadd.xlane.f32.xlu0 %v365
        %v367 = vpop.xlane.xlu0 %366
        %v368 = vsel %vm361, %v347, 0.0
        %369 = vadd.xlane.f32.xlu0 %v368
        %v370 = vpop.xlane.xlu0 %369
        %v371 = vsel %vm361, %v348, 0.0
        %372 = vadd.xlane.f32.xlu0 %v371
        %v373 = vpop.xlane.xlu0 %372
        %v374 = vsel %vm361, %v349, 0.0
        %375 = vadd.xlane.f32.xlu0 %v374
        %v376 = vpop.xlane.xlu0 %375
        %v377 = vsel %vm361, %v350, 0.0
        %378 = vadd.xlane.f32.xlu0 %v377
        %v379 = vpop.xlane.xlu0 %378
        %v380 = vsel %vm361, %v351, 0.0
        %381 = vadd.xlane.f32.xlu0 %v380
        %v382 = vpop.xlane.xlu0 %381
        %v383 = vsel %vm361, %v352, 0.0
        %384 = vadd.xlane.f32.xlu0 %v383
        %v385 = vpop.xlane.xlu0 %384
        %v386 = vsel %vm361, %v353, 0.0
        %387 = vadd.xlane.f32.xlu0 %v386
        %v388 = vpop.xlane.xlu0 %387
        %v389 = vsel %vm361, %v354, 0.0
        %390 = vadd.xlane.f32.xlu0 %v389
        %v391 = vpop.xlane.xlu0 %390
        %v392 = vsel %vm361, %v355, 0.0
        %393 = vadd.xlane.f32.xlu0 %v392
        %v394 = vpop.xlane.xlu0 %393
        %v395 = vsel %vm361, %v356, 0.0
        %396 = vadd.xlane.f32.xlu0 %v395
        %v397 = vpop.xlane.xlu0 %396
        %v398 = vsel %vm361, %v357, 0.0
        %399 = vadd.xlane.f32.xlu0 %v398
        %v400 = vpop.xlane.xlu0 %399
        %v401 = vsel %vm361, %v358, 0.0
        %402 = vadd.xlane.f32.xlu0 %v401
        %v403 = vpop.xlane.xlu0 %402
        %v404 = vsel %vm361, %v359, 0.0
        %405 = vadd.xlane.f32.xlu0 %v404
        %v406 = vpop.xlane.xlu0 %405
        %v407 = vsel %vm361, %v360, 0.0
        %408 = vadd.xlane.f32.xlu0 %v407
        %v409 = vpop.xlane.xlu0 %408
        %v410 = vadd.f32 %v364, %v388
        %v411 = vadd.f32 %v367, %v391
        %v412 = vadd.f32 %v370, %v394
        %v413 = vadd.f32 %v373, %v397
        %v414 = vadd.f32 %v376, %v400
        %v415 = vadd.f32 %v379, %v403
        %v416 = vadd.f32 %v382, %v406
        %v417 = vadd.f32 %v385, %v409
        %v418 = vmul.f32 %v410, 0.0078125
        %v419 = vmul.f32 %v411, 0.0078125
        %v420 = vmul.f32 %v412, 0.0078125
        %v421 = vmul.f32 %v413, 0.0078125
        %v422 = vmul.f32 %v414, 0.0078125
        %v423 = vmul.f32 %v415, 0.0078125
        %v424 = vmul.f32 %v416, 0.0078125
        %v425 = vmul.f32 %v417, 0.0078125
        %v426 = vsub.f32 %v345, %v418
        %v427 = vsub.f32 %v346, %v419
        %v428 = vsub.f32 %v347, %v420
        %v429 = vsub.f32 %v348, %v421
        %v430 = vsub.f32 %v349, %v422
        %v431 = vsub.f32 %v350, %v423
        %v432 = vsub.f32 %v351, %v424
        %v433 = vsub.f32 %v352, %v425
        %v434 = vsub.f32 %v353, %v418
        %v435 = vsub.f32 %v354, %v419
        %v436 = vsub.f32 %v355, %v420
        %v437 = vsub.f32 %v356, %v421
        %v438 = vsub.f32 %v357, %v422
        %v439 = vsub.f32 %v358, %v423
        %v440 = vsub.f32 %v359, %v424
        %v441 = vsub.f32 %v360, %v425
        %v442 = vmul.f32 %v426, %v426
        %v443 = vmul.f32 %v427, %v427
        %v444 = vmul.f32 %v428, %v428
        %v445 = vmul.f32 %v429, %v429
        %v446 = vmul.f32 %v430, %v430
        %v447 = vmul.f32 %v431, %v431
        %v448 = vmul.f32 %v432, %v432
        %v449 = vmul.f32 %v433, %v433
        %v450 = vsel %vm361, %v442, 0.0
        %451 = vadd.xlane.f32.xlu0 %v450
        %v452 = vpop.xlane.xlu0 %451
        %v453 = vsel %vm361, %v443, 0.0
        %454 = vadd.xlane.f32.xlu0 %v453
        %v455 = vpop.xlane.xlu0 %454
        %v456 = vsel %vm361, %v444, 0.0
        %457 = vadd.xlane.f32.xlu0 %v456
        %v458 = vpop.xlane.xlu0 %457
        %v459 = vsel %vm361, %v445, 0.0
        %460 = vadd.xlane.f32.xlu0 %v459
        %v461 = vpop.xlane.xlu0 %460
        %v462 = vsel %vm361, %v446, 0.0
        %463 = vadd.xlane.f32.xlu0 %v462
        %v464 = vpop.xlane.xlu0 %463
        %v465 = vsel %vm361, %v447, 0.0
        %466 = vadd.xlane.f32.xlu0 %v465
        %v467 = vpop.xlane.xlu0 %466
        %v468 = vsel %vm361, %v448, 0.0
        %469 = vadd.xlane.f32.xlu0 %v468
        %v470 = vpop.xlane.xlu0 %469
        %v471 = vsel %vm361, %v449, 0.0
        %472 = vadd.xlane.f32.xlu0 %v471
        %v473 = vpop.xlane.xlu0 %472
        %v474 = vmul.f32 %v434, %v434
        %v475 = vmul.f32 %v435, %v435
        %v476 = vmul.f32 %v436, %v436
        %v477 = vmul.f32 %v437, %v437
        %v478 = vmul.f32 %v438, %v438
        %v479 = vmul.f32 %v439, %v439
        %v480 = vmul.f32 %v440, %v440
        %v481 = vmul.f32 %v441, %v441
        %v482 = vsel %vm361, %v474, 0.0
        %483 = vadd.xlane.f32.xlu0 %v482
        %v484 = vpop.xlane.xlu0 %483
        %v485 = vsel %vm361, %v475, 0.0
        %486 = vadd.xlane.f32.xlu0 %v485
        %v487 = vpop.xlane.xlu0 %486
        %v488 = vsel %vm361, %v476, 0.0
        %489 = vadd.xlane.f32.xlu0 %v488
        %v490 = vpop.xlane.xlu0 %489
        %v491 = vsel %vm361, %v477, 0.0
        %492 = vadd.xlane.f32.xlu0 %v491
        %v493 = vpop.xlane.xlu0 %492
        %v494 = vsel %vm361, %v478, 0.0
        %495 = vadd.xlane.f32.xlu0 %v494
        %v496 = vpop.xlane.xlu0 %495
        %v497 = vsel %vm361, %v479, 0.0
        %498 = vadd.xlane.f32.xlu0 %v497
        %v499 = vpop.xlane.xlu0 %498
        %v500 = vsel %vm361, %v480, 0.0
        %501 = vadd.xlane.f32.xlu0 %v500
        %v502 = vpop.xlane.xlu0 %501
        %v503 = vsel %vm361, %v481, 0.0
        %504 = vadd.xlane.f32.xlu0 %v503
        %v505 = vpop.xlane.xlu0 %504
        %v506 = vadd.f32 %v452, %v484
        %v507 = vadd.f32 %v455, %v487
        %v508 = vadd.f32 %v458, %v490
        %v509 = vadd.f32 %v461, %v493
        %v510 = vadd.f32 %v464, %v496
        %v511 = vadd.f32 %v467, %v499
        %v512 = vadd.f32 %v470, %v502
        %v513 = vadd.f32 %v473, %v505
        %v514 = vmul.f32 %v506, 0.0078125
        %v515 = vmul.f32 %v507, 0.0078125
        %v516 = vmul.f32 %v508, 0.0078125
        %v517 = vmul.f32 %v509, 0.0078125
        %v518 = vmul.f32 %v510, 0.0078125
        %v519 = vmul.f32 %v511, 0.0078125
        %v520 = vmul.f32 %v512, 0.0078125
        %v521 = vmul.f32 %v513, 0.0078125
        %v522 = vadd.f32 %v514, 1e-05
        %v523 = vadd.f32 %v515, 1e-05
        %v524 = vadd.f32 %v516, 1e-05
        %v525 = vadd.f32 %v517, 1e-05
        %v526 = vadd.f32 %v518, 1e-05
        %v527 = vadd.f32 %v519, 1e-05
        %v528 = vadd.f32 %v520, 1e-05
        %v529 = vadd.f32 %v521, 1e-05
        %v530 = vrsqrt.pop %v522
        %v531 = vrsqrt.pop %v523
        %v532 = vrsqrt.pop %v524
        %v533 = vrsqrt.pop %v525
        %v534 = vrsqrt.pop %v526
        %v535 = vrsqrt.pop %v527
        %v536 = vrsqrt.pop %v528
        %v537 = vrsqrt.pop %v529
        %v538 = vmul.f32 %v426, %v530
        %v539 = vmul.f32 %v427, %v531
        %v540 = vmul.f32 %v428, %v532
        %v541 = vmul.f32 %v429, %v533
        %v542 = vmul.f32 %v430, %v534
        %v543 = vmul.f32 %v431, %v535
        %v544 = vmul.f32 %v432, %v536
        %v545 = vmul.f32 %v433, %v537
        %v546 = vmul.f32 %v434, %v530
        %v547 = vmul.f32 %v435, %v531
        %v548 = vmul.f32 %v436, %v532
        %v549 = vmul.f32 %v437, %v533
        %v550 = vmul.f32 %v438, %v534
        %v551 = vmul.f32 %v439, %v535
        %v552 = vmul.f32 %v440, %v536
        %v553 = vmul.f32 %v441, %v537
        %v554 = vld [vmem:[#allocation6] sm:$0xff]
        %v555 = vld [vmem:[#allocation6 + $0x8] sm:$0xff]
        %v556 = vld [vmem:[#allocation6 + $0x10] sm:$0xff]
        %v557 = vld [vmem:[#allocation6 + $0x18] sm:$0xff]
        %v558 = vld [vmem:[#allocation6 + $0x20] sm:$0xff]
        %v559 = vld [vmem:[#allocation6 + $0x28] sm:$0xff]
        %v560 = vld [vmem:[#allocation6 + $0x30] sm:$0xff]
        %v561 = vld [vmem:[#allocation6 + $0x38] sm:$0xff]
        %v562 = vld [vmem:[#allocation7] sm:$0xff]
        %v563 = vld [vmem:[#allocation7 + $0x8] sm:$0xff]
        %v564 = vld [vmem:[#allocation7 + $0x10] sm:$0xff]
        %v565 = vld [vmem:[#allocation7 + $0x18] sm:$0xff]
        %v566 = vld [vmem:[#allocation7 + $0x20] sm:$0xff]
        %v567 = vld [vmem:[#allocation7 + $0x28] sm:$0xff]
        %v568 = vld [vmem:[#allocation7 + $0x30] sm:$0xff]
        %v569 = vld [vmem:[#allocation7 + $0x38] sm:$0xff]
        %v571 = vsel %vm361, %v546, 0
        %v574 = vsel %vm361, %v547, 0
        %v577 = vsel %vm361, %v548, 0
        %v580 = vsel %vm361, %v549, 0
        %v583 = vsel %vm361, %v550, 0
        %v586 = vsel %vm361, %v551, 0
        %v589 = vsel %vm361, %v552, 0
        %v592 = vsel %vm361, %v553, 0
        %594 = vmatprep.subr.mxu0 0.0
        %595 = vmatpush1.msra.mxu0 %v562
        %596 = vmatprep.subr.mxu0 0.0
        %597 = vmatpush1.msra.mxu0 %v563
        %598 = vmatprep.subr.mxu0 0.0
        %599 = vmatpush1.msra.mxu0 %v564
        %600 = vmatprep.subr.mxu0 0.0
        %601 = vmatpush1.msra.mxu0 %v565
        %602 = vmatprep.subr.mxu0 0.0
        %603 = vmatpush1.msra.mxu0 %v566
        %604 = vmatprep.subr.mxu0 0.0
        %605 = vmatpush1.msra.mxu0 %v567
        %606 = vmatprep.subr.mxu0 0.0
        %607 = vmatpush1.msra.mxu0 %v568
        %608 = vmatprep.subr.mxu0 0.0
        %609 = vmatpush1.msra.mxu0 %v569
        %610 = vmatprep.subr.mxu0 0.0
        %611 = vmatpush1.msra.mxu0 0.0
        %612 = vmatprep.subr.mxu0 0.0
        %613 = vmatpush1.msra.mxu0 0.0
        %614 = vmatprep.subr.mxu0 0.0
        %615 = vmatpush1.msra.mxu0 0.0
        %616 = vmatprep.subr.mxu0 0.0
        %617 = vmatpush1.msra.mxu0 0.0
        %618 = vmatprep.subr.mxu0 0.0
        %619 = vmatpush1.msra.mxu0 0.0
        %620 = vmatprep.subr.mxu0 0.0
        %621 = vmatpush1.msra.mxu0 0.0
        %622 = vmatprep.subr.mxu0 0.0
        %623 = vmatpush1.msra.mxu0 0.0
        %624 = vmatprep.subr.mxu0 0.0
        %625 = vmatpush1.msra.mxu0 0.0
        %626 = vmatprep.subr.mxu0 0.0
        %627 = vmatpush1.msra.mxu0 0.0
        %628 = vmatprep.subr.mxu0 0.0
        %629 = vmatpush1.msra.mxu0 0.0
        %630 = vmatprep.subr.mxu0 0.0
        %631 = vmatpush1.msra.mxu0 0.0
        %632 = vmatprep.subr.mxu0 0.0
        %633 = vmatpush1.msra.mxu0 0.0
        %634 = vmatprep.subr.mxu0 0.0
        %635 = vmatpush1.msra.mxu0 0.0
        %636 = vmatprep.subr.mxu0 0.0
        %637 = vmatpush1.msra.mxu0 0.0
        %638 = vmatprep.subr.mxu0 0.0
        %639 = vmatpush1.msra.mxu0 0.0
        %640 = vmatprep.subr.mxu0 0.0
        %641 = vmatpush1.msra.mxu0 0.0
        %642 = vmatprep.subr.mxu0 0.0
        %643 = vmatpush1.msra.mxu0 0.0
        %644 = vmatprep.subr.mxu0 0.0
        %645 = vmatpush1.msra.mxu0 0.0
        %646 = vmatprep.subr.mxu0 0.0
        %647 = vmatpush1.msra.mxu0 0.0
        %648 = vmatprep.subr.mxu0 0.0
        %649 = vmatpush1.msra.mxu0 0.0
        %650 = vmatprep.subr.mxu0 0.0
        %651 = vmatpush1.msra.mxu0 0.0
        %652 = vmatprep.subr.mxu0 0.0
        %653 = vmatpush1.msra.mxu0 0.0
        %654 = vmatprep.subr.mxu0 0.0
        %655 = vmatpush1.msra.mxu0 0.0
        %656 = vmatprep.subr.mxu0 0.0
        %657 = vmatpush1.msra.mxu0 0.0
        %658 = vmatprep.mubr.f32.mxu0 0.0
        %659 = vmatmul.mubr.f32.gmra.mrb[0].mxu0 %v571
        %v660 = vpop.f32.mrb[0].mxu0
        %v661 = vadd.f32 0.0, %v660
        %v662 = vpop.f32.mrb[0].mxu0
        %663 = vmatprep.mubr.f32.mxu0 0.0
        %664 = vmatmul.mubr.f32.gmra.mrb[0].mxu0 %v574
        %v665 = vpop.f32.mrb[0].mxu0
        %v666 = vadd.f32 0.0, %v665
        %v667 = vpop.f32.mrb[0].mxu0
        %668 = vmatprep.mubr.f32.mxu0 0.0
        %669 = vmatmul.mubr.f32.gmra.mrb[0].mxu0 %v577
        %v670 = vpop.f32.mrb[0].mxu0
        %v671 = vadd.f32 0.0, %v670
        %v672 = vpop.f32.mrb[0].mxu0
        %673 = vmatprep.mubr.f32.mxu0 0.0
        %674 = vmatmul.mubr.f32.gmra.mrb[0].mxu0 %v580
        %v675 = vpop.f32.mrb[0].mxu0
        %v676 = vadd.f32 0.0, %v675
        %v677 = vpop.f32.mrb[0].mxu0
        %678 = vmatprep.mubr.f32.mxu0 0.0
        %679 = vmatmul.mubr.f32.gmra.mrb[0].mxu0 %v583
        %v680 = vpop.f32.mrb[0].mxu0
        %v681 = vadd.f32 0.0, %v680
        %v682 = vpop.f32.mrb[0].mxu0
        %683 = vmatprep.mubr.f32.mxu0 0.0
        %684 = vmatmul.mubr.f32.gmra.mrb[0].mxu0 %v586
        %v685 = vpop.f32.mrb[0].mxu0
        %v686 = vadd.f32 0.0, %v685
        %v687 = vpop.f32.mrb[0].mxu0
        %688 = vmatprep.mubr.f32.mxu0 0.0
        %689 = vmatmul.mubr.f32.gmra.mrb[0].mxu0 %v589
        %v690 = vpop.f32.mrb[0].mxu0
        %v691 = vadd.f32 0.0, %v690
        %v692 = vpop.f32.mrb[0].mxu0
        %693 = vmatprep.mubr.f32.mxu0 0.0
        %694 = vmatmul.mubr.f32.gmra.mrb[0].mxu0 %v592
        %v695 = vpop.f32.mrb[0].mxu0
        %v696 = vadd.f32 0.0, %v695
        %v697 = vpop.f32.mrb[0].mxu0
        %698 = vdwg.mxu0
        %v700 = vsel %vm361, %v538, 0
        %v703 = vsel %vm361, %v539, 0
        %v706 = vsel %vm361, %v540, 0
        %v709 = vsel %vm361, %v541, 0
        %v712 = vsel %vm361, %v542, 0
        %v715 = vsel %vm361, %v543, 0
        %v718 = vsel %vm361, %v544, 0
        %v721 = vsel %vm361, %v545, 0
        %723 = vmatprep.subr.mxu0 0.0
        %724 = vmatpush1.msra.mxu0 %v554
        %725 = vmatprep.subr.mxu0 0.0
        %726 = vmatpush1.msra.mxu0 %v555
        %727 = vmatprep.subr.mxu0 0.0
        %728 = vmatpush1.msra.mxu0 %v556
        %729 = vmatprep.subr.mxu0 0.0
        %730 = vmatpush1.msra.mxu0 %v557
        %731 = vmatprep.subr.mxu0 0.0
        %732 = vmatpush1.msra.mxu0 %v558
        %733 = vmatprep.subr.mxu0 0.0
        %734 = vmatpush1.msra.mxu0 %v559
        %735 = vmatprep.subr.mxu0 0.0
        %736 = vmatpush1.msra.mxu0 %v560
        %737 = vmatprep.subr.mxu0 0.0
        %738 = vmatpush1.msra.mxu0 %v561
        %739 = vmatprep.subr.mxu0 0.0
        %740 = vmatpush1.msra.mxu0 0.0
        %741 = vmatprep.subr.mxu0 0.0
        %742 = vmatpush1.msra.mxu0 0.0
        %743 = vmatprep.subr.mxu0 0.0
        %744 = vmatpush1.msra.mxu0 0.0
        %745 = vmatprep.subr.mxu0 0.0
        %746 = vmatpush1.msra.mxu0 0.0
        %747 = vmatprep.subr.mxu0 0.0
        %748 = vmatpush1.msra.mxu0 0.0
        %749 = vmatprep.subr.mxu0 0.0
        %750 = vmatpush1.msra.mxu0 0.0
        %751 = vmatprep.subr.mxu0 0.0
        %752 = vmatpush1.msra.mxu0 0.0
        %753 = vmatprep.subr.mxu0 0.0
        %754 = vmatpush1.msra.mxu0 0.0
        %755 = vmatprep.subr.mxu0 0.0
        %756 = vmatpush1.msra.mxu0 0.0
        %757 = vmatprep.subr.mxu0 0.0
        %758 = vmatpush1.msra.mxu0 0.0
        %759 = vmatprep.subr.mxu0 0.0
        %760 = vmatpush1.msra.mxu0 0.0
        %761 = vmatprep.subr.mxu0 0.0
        %762 = vmatpush1.msra.mxu0 0.0
        %763 = vmatprep.subr.mxu0 0.0
        %764 = vmatpush1.msra.mxu0 0.0
        %765 = vmatprep.subr.mxu0 0.0
        %766 = vmatpush1.msra.mxu0 0.0
        %767 = vmatprep.subr.mxu0 0.0
        %768 = vmatpush1.msra.mxu0 0.0
        %769 = vmatprep.subr.mxu0 0.0
        %770 = vmatpush1.msra.mxu0 0.0
        %771 = vmatprep.subr.mxu0 0.0
        %772 = vmatpush1.msra.mxu0 0.0
        %773 = vmatprep.subr.mxu0 0.0
        %774 = vmatpush1.msra.mxu0 0.0
        %775 = vmatprep.subr.mxu0 0.0
        %776 = vmatpush1.msra.mxu0 0.0
        %777 = vmatprep.subr.mxu0 0.0
        %778 = vmatpush1.msra.mxu0 0.0
        %779 = vmatprep.subr.mxu0 0.0
        %780 = vmatpush1.msra.mxu0 0.0
        %781 = vmatprep.subr.mxu0 0.0
        %782 = vmatpush1.msra.mxu0 0.0
        %783 = vmatprep.subr.mxu0 0.0
        %784 = vmatpush1.msra.mxu0 0.0
        %785 = vmatprep.subr.mxu0 0.0
        %786 = vmatpush1.msra.mxu0 0.0
        %787 = vmatprep.mubr.f32.mxu0 0.0
        %788 = vmatmul.mubr.f32.gmra.mrb[0].mxu0 %v700
        %v789 = vpop.f32.mrb[0].mxu0
        %v790 = vadd.f32 %v661, %v789
        %v791 = vpop.f32.mrb[0].mxu0
        %792 = vmatprep.mubr.f32.mxu0 0.0
        %793 = vmatmul.mubr.f32.gmra.mrb[0].mxu0 %v703
        %v794 = vpop.f32.mrb[0].mxu0
        %v795 = vadd.f32 %v666, %v794
        %v796 = vpop.f32.mrb[0].mxu0
        %797 = vmatprep.mubr.f32.mxu0 0.0
        %798 = vmatmul.mubr.f32.gmra.mrb[0].mxu0 %v706
        %v799 = vpop.f32.mrb[0].mxu0
        %v800 = vadd.f32 %v671, %v799
        %v801 = vpop.f32.mrb[0].mxu0
        %802 = vmatprep.mubr.f32.mxu0 0.0
        %803 = vmatmul.mubr.f32.gmra.mrb[0].mxu0 %v709
        %v804 = vpop.f32.mrb[0].mxu0
        %v805 = vadd.f32 %v676, %v804
        %v806 = vpop.f32.mrb[0].mxu0
        %807 = vmatprep.mubr.f32.mxu0 0.0
        %808 = vmatmul.mubr.f32.gmra.mrb[0].mxu0 %v712
        %v809 = vpop.f32.mrb[0].mxu0
        %v810 = vadd.f32 %v681, %v809
        %v811 = vpop.f32.mrb[0].mxu0
        %812 = vmatprep.mubr.f32.mxu0 0.0
        %813 = vmatmul.mubr.f32.gmra.mrb[0].mxu0 %v715
        %v814 = vpop.f32.mrb[0].mxu0
        %v815 = vadd.f32 %v686, %v814
        %v816 = vpop.f32.mrb[0].mxu0
        %817 = vmatprep.mubr.f32.mxu0 0.0
        %818 = vmatmul.mubr.f32.gmra.mrb[0].mxu0 %v718
        %v819 = vpop.f32.mrb[0].mxu0
        %v820 = vadd.f32 %v691, %v819
        %v821 = vpop.f32.mrb[0].mxu0
        %822 = vmatprep.mubr.f32.mxu0 0.0
        %823 = vmatmul.mubr.f32.gmra.mrb[0].mxu0 %v721
        %v824 = vpop.f32.mrb[0].mxu0
        %v825 = vadd.f32 %v696, %v824
        %v826 = vpop.f32.mrb[0].mxu0
        %827 = vdwg.mxu0
        %v828 = vld [vmem:[%s4] sm:$0x1]
        %v830 = vlaneseq
        %v831 = vshrl.u32 %v830, 7
        %v832 = vsub.s32 0, %v831
        %v833 = vrot.slane %v828, %v832
        %v835 = vadd.f32 %v790, %v833
        %v836 = vadd.f32 %v795, %v833
        %v837 = vadd.f32 %v800, %v833
        %v838 = vadd.f32 %v805, %v833
        %v839 = vadd.f32 %v810, %v833
        %v840 = vadd.f32 %v815, %v833
        %v841 = vadd.f32 %v820, %v833
        %v842 = vadd.f32 %v825, %v833
        %843 = vst.msk [vmem:[%s342] sm:$0xff] %vm361, %v835
        %844 = vst.msk [vmem:[%s342 + $0x8] sm:$0xff] %vm361, %v836
        %845 = vst.msk [vmem:[%s342 + $0x10] sm:$0xff] %vm361, %v837
        %846 = vst.msk [vmem:[%s342 + $0x18] sm:$0xff] %vm361, %v838
        %847 = vst.msk [vmem:[%s342 + $0x20] sm:$0xff] %vm361, %v839
        %848 = vst.msk [vmem:[%s342 + $0x28] sm:$0xff] %vm361, %v840
        %849 = vst.msk [vmem:[%s342 + $0x30] sm:$0xff] %vm361, %v841
        %850 = vst.msk [vmem:[%s342 + $0x38] sm:$0xff] %vm361, %v842
        %s851 = sadd.s32 %s27, %s28
        %s852 = smul.u32 8, %s851
        %p853 = scmp.lt.s32.totalorder %s852, 15
        %s854 = scalar_select %p853, %s852, 15
        %s855 = smul.addr %s854, 8
        %s856 = scalar_lea.vmem %s5, %s855
        // Predicated region
        $region57: #{tpu_custom_call.1} parent=39 // pred_check
          %p857 = pneg %p174
        $region58: #{tpu_custom_call.1} parent=39 // pred_check_branch
          %859 = sbr.rel (%p857) target = $region60
        $region59: #{tpu_custom_call.1} parent=39 // pred_region
          %s860 = sadd.s32 %s27, %s28
          %s861 = smul.u32 8, %s860
        $region60: #{tpu_custom_call.1} parent=39 // pred_fallthru
          _
      $region40: #{tpu_custom_call.1} parent=5 // pred_fallthru
        _
      %p862 = scmp.le.s32.totalorder 2, %s18
      // Predicated region
      $region61: #{tpu_custom_call.1} parent=5 // pred_check
        %p863 = pneg %p862
      $region62: #{tpu_custom_call.1} parent=5 // pred_check_branch
        %865 = sbr.rel (%p863) target = $region64
      $region63: #{tpu_custom_call.1} parent=5 // pred_region
        %s866 = ssub.s32 %s18, 2
        // Predicated region
        $region65: #{tpu_custom_call.1} parent=63 // pred_check
          %p867 = pneg %p180
        $region66: #{tpu_custom_call.1} parent=63 // pred_check_branch
          %869 = sbr.rel (%p867) target = $region68
        $region67: #{tpu_custom_call.1} parent=63 // pred_region
          %s870 = sadd.s32 %s29, %s30
          %s871 = smul.u32 8, %s870
          %p872 = scmp.lt.s32.totalorder %s871, 15
          %s873 = scalar_select %p872, %s871, 15
          %s874 = smul.addr %s873, 8
          %s875 = scalar_lea.vmem %s5, %s874
        $region68: #{tpu_custom_call.1} parent=63 // pred_fallthru
          _
      $region64: #{tpu_custom_call.1} parent=5 // pred_fallthru
        _
    $region6: #{tpu_custom_call.1} parent=1 // loop_footer
      %s22 = sadd.s32 1, %s18
    $region7: #{tpu_custom_call.1} parent=1 // loop_footer_branch
      %17 = sbr.rel target = $region3
    $region8: #{tpu_custom_call.1} parent=1 // loop_exit
      _
    %876 = vsyncpa [#allocation3], 1
    %s877 = scalar_lea.sflag [#allocation3], 1
    %878 = vsyncpa %s877, 1
    %879 = vsyncpa [#allocation5], 1
    %s880 = scalar_lea.sflag [#allocation5], 1
    %881 = vsyncpa %s880, 1
    %882 = vsyncpa [#allocation8], 1

</llo_original>
